<compile_context>
chip_gen: v6e
topology: v6e:2x2x1
jax: 0.10.0
libtpu: 0.0.40
codegen_flags: <defaults>
</compile_context>

<pallas_src>
import functools

import jax
import jax.numpy as jnp
from jax.experimental import pallas as pl
from jax.experimental.pallas import tpu as pltpu


# ----------------------------------------------------------------------------
# Pallas kernels
# ----------------------------------------------------------------------------
def _mm_epilogue_kernel(*refs, relu, has_scale):
    """y = (x @ w) [* scale] + bias, optional ReLU.
    MXU matmul (bf16 operands, f32 accumulate) + f32 VPU epilogue."""
    if has_scale:
        x_ref, w_ref, s_ref, b_ref, o_ref = refs
    else:
        x_ref, w_ref, b_ref, o_ref = refs
    y = jnp.dot(x_ref[...], w_ref[...], preferred_element_type=jnp.float32)
    if has_scale:
        y = y * s_ref[...]
    y = y + b_ref[...]
    if relu:
        y = jnp.maximum(y, 0.0)
    o_ref[...] = y.astype(o_ref.dtype)


def pallas_matmul_affine(x, w, bias, scale=None, relu=False, tm=256):
    """x:(M,K) @ w:(K,N) with per-column affine epilogue, M-tiled.

    * M is tiled with grid=(cdiv(M,tm),) and the axis is marked "parallel"
      (double-buffered HBM->VMEM DMA overlaps MXU work; shards across the two
      TensorCores on v7x).  K and N stay un-tiled (K is small here) so no
      accumulator is needed and VMEM stays ~tm*(K+N) regardless of M.
    * x and w are cast to bf16 for the MXU (native on v5e/v6e/v7x, halves DMA
      bytes); accumulation, epilogue and output stay f32.
    """
    M, K = x.shape
    _, N = w.shape
    tm = max(8, min(tm, M))
    grid_m = pl.cdiv(M, tm)

    args = [x.astype(jnp.bfloat16), w.astype(jnp.bfloat16)]
    in_specs = [pl.BlockSpec((tm, K), lambda i: (i, 0)),
                pl.BlockSpec((K, N), lambda i: (0, 0))]
    if scale is not None:
        args.append(scale.reshape(1, N).astype(jnp.float32))
        in_specs.append(pl.BlockSpec((1, N), lambda i: (0, 0)))
    args.append(bias.reshape(1, N).astype(jnp.float32))
    in_specs.append(pl.BlockSpec((1, N), lambda i: (0, 0)))

    return pl.pallas_call(
        functools.partial(_mm_epilogue_kernel, relu=relu,
                          has_scale=scale is not None),
        out_shape=jax.ShapeDtypeStruct((M, N), jnp.float32),
        grid=(grid_m,),
        in_specs=in_specs,
        out_specs=pl.BlockSpec((tm, N), lambda i: (i, 0)),
        compiler_params=pltpu.CompilerParams(dimension_semantics=("parallel",)),
    )(*args)


def _maxpool_phase_kernel(p00_ref, p01_ref, p10_ref, p11_ref, o_ref, *, Ho, Wo):
    """out[i,j] = max_{dy,dx in 0..2} xp[2i+dy, 2j+dx].
    The four stride-2 phases of the padded map are supplied, so only contiguous
    unit shifts + elementwise max are needed (all in VMEM, no strided access)."""
    a = p00_ref[...]      # xp[2i  , 2j  ]
    b = p01_ref[...]      # xp[2i  , 2j+1]
    c = p10_ref[...]      # xp[2i+1, 2j  ]
    d = p11_ref[...]      # xp[2i+1, 2j+1]
    m = a[:, :Ho, :Wo, :]                      # (dy=0, dx=0)
    m = jnp.maximum(m, a[:, :Ho, 1:, :])       # (dy=0, dx=2)
    m = jnp.maximum(m, a[:, 1:, :Wo, :])       # (dy=2, dx=0)
    m = jnp.maximum(m, a[:, 1:, 1:, :])        # (dy=2, dx=2)
    m = jnp.maximum(m, b[:, :Ho, :Wo, :])      # (dy=0, dx=1)
    m = jnp.maximum(m, b[:, 1:, :Wo, :])       # (dy=2, dx=1)
    m = jnp.maximum(m, c[:, :Ho, :Wo, :])      # (dy=1, dx=0)
    m = jnp.maximum(m, c[:, :Ho, 1:, :])       # (dy=1, dx=2)
    m = jnp.maximum(m, d[:, :Ho, :Wo, :])      # (dy=1, dx=1)
    o_ref[...] = m


def pallas_maxpool2d_3x3_s2_p1(x):
    """MaxPool2d(kernel=3, stride=2, padding=1) on NHWC.
    No 9x window-stack in HBM: the padded map is split into 4 stride-2 phases
    (wrapper glue, ~1x data movement) and the kernel reduces in VMEM."""
    B, H, W, C = x.shape
    Ho = (H + 2 - 3) // 2 + 1
    Wo = (W + 2 - 3) // 2 + 1
    Hp2, Wp2 = 2 * (Ho + 1), 2 * (Wo + 1)
    xp = jnp.pad(x, ((0, 0), (1, Hp2 - H - 1), (1, Wp2 - W - 1), (0, 0)),
                 constant_values=-jnp.inf)
    xr = xp.reshape(B, Ho + 1, 2, Wo + 1, 2, C)
    phases = (xr[:, :, 0, :, 0, :], xr[:, :, 0, :, 1, :],
              xr[:, :, 1, :, 0, :], xr[:, :, 1, :, 1, :])
    in_spec = pl.BlockSpec((1, Ho + 1, Wo + 1, C), lambda b: (b, 0, 0, 0))
    return pl.pallas_call(
        functools.partial(_maxpool_phase_kernel, Ho=Ho, Wo=Wo),
        out_shape=jax.ShapeDtypeStruct((B, Ho, Wo, C), x.dtype),
        grid=(B,),
        in_specs=[in_spec, in_spec, in_spec, in_spec],
        out_specs=pl.BlockSpec((1, Ho, Wo, C), lambda b: (b, 0, 0, 0)),
        compiler_params=pltpu.CompilerParams(dimension_semantics=("parallel",)),
    )(*phases)


def _make_fused_heads_kernel(n_bbox, n_scene):
    def kernel(*refs):
        # refs: hs, class_w, class_b, (w,b)*n_bbox, (w,b)*n_scene,
        #       out_class, out_bbox, out_scene
        hs_ref, cw_ref, cb_ref = refs[0], refs[1], refs[2]
        idx = 3
        bbox_refs = refs[idx:idx + 2 * n_bbox]
        idx += 2 * n_bbox
        scene_refs = refs[idx:idx + 2 * n_scene]
        idx += 2 * n_scene
        oc_ref, ob_ref, os_ref = refs[idx], refs[idx + 1], refs[idx + 2]

        h = hs_ref[...]

        def mlp(xv, wb_refs):
            n = len(wb_refs) // 2
            for i in range(n):
                xv = jnp.dot(xv, wb_refs[2 * i][...],
                             preferred_element_type=jnp.float32) + wb_refs[2 * i + 1][...]
                if i < n - 1:
                    xv = jnp.maximum(xv, 0.0)
            return xv

        oc_ref[...] = (jnp.dot(h, cw_ref[...], preferred_element_type=jnp.float32)
                       + cb_ref[...]).astype(oc_ref.dtype)
        ob_ref[...] = mlp(h, bbox_refs).astype(ob_ref.dtype)
        os_ref[...] = mlp(h, scene_refs).astype(os_ref.dtype)
    return kernel


def pallas_fused_heads(hs2d, class_w, class_b, bbox_params, scene_params):
    """class Linear + bbox MLP + scene MLP fused into ONE pallas_call:
    all (tiny) weights live in VMEM, intermediates never round-trip HBM,
    and seven launch-overhead-dominated matmul calls collapse into one."""
    M, _ = hs2d.shape
    args = [hs2d.astype(jnp.float32),
            class_w.astype(jnp.float32),
            class_b.reshape(1, -1).astype(jnp.float32)]
    for w, b in list(bbox_params) + list(scene_params):
        args.append(w.astype(jnp.float32))
        args.append(b.reshape(1, -1).astype(jnp.float32))
    out_shape = (
        jax.ShapeDtypeStruct((M, class_w.shape[1]), jnp.float32),
        jax.ShapeDtypeStruct((M, bbox_params[-1][0].shape[1]), jnp.float32),
        jax.ShapeDtypeStruct((M, scene_params[-1][0].shape[1]), jnp.float32),
    )
    return pl.pallas_call(
        _make_fused_heads_kernel(len(bbox_params), len(scene_params)),
        out_shape=out_shape,
    )(*args)


# ----------------------------------------------------------------------------
# Glue: im2col conv (tiled matmul in Pallas), FrozenBN folding
# ----------------------------------------------------------------------------
def conv2d_bn_relu_pallas(x, w_hwio, scale, bias, *, stride, pad, relu):
    """Conv (no conv-bias) + folded FrozenBatchNorm affine + optional ReLU.
    im2col is wrapper glue; the matmul + affine + relu runs in one M-tiled,
    bf16-operand Pallas kernel so the patches tensor is never VMEM-resident
    as a whole.
    # TODO(synk): build the im2col patches inside the kernel (shifted windows
    # over the padded input) to remove the kh*kw x HBM expansion at large
    # resolutions."""
    B, H, W, Cin = x.shape
    kh, kw, _, Cout = w_hwio.shape
    xp = jnp.pad(x, ((0, 0), (pad, pad), (pad, pad), (0, 0)))
    Ho = (H + 2 * pad - kh) // stride + 1
    Wo = (W + 2 * pad - kw) // stride + 1
    cols = []
    for dy in range(kh):
        for dx in range(kw):
            cols.append(xp[:, dy:dy + stride * (Ho - 1) + 1:stride,
                           dx:dx + stride * (Wo - 1) + 1:stride, :])
    patches = jnp.stack(cols, axis=3)                       # (B,Ho,Wo,kh*kw,Cin)
    patches = patches.reshape(B * Ho * Wo, kh * kw * Cin)
    wf = w_hwio.reshape(kh * kw * Cin, Cout)                # rows ordered (dy,dx,cin)
    y = pallas_matmul_affine(patches, wf, bias, scale=scale, relu=relu)
    return y.reshape(B, Ho, Wo, Cout)


def frozen_bn_affine(weight, bias, running_mean, running_var, eps=1e-5):
    # matches FrozenBatchNorm2d.forward: scale = w*rsqrt(rv+eps); bias = b - rm*scale
    scale = weight * jax.lax.rsqrt(running_var + eps)
    return scale, bias - running_mean * scale


# ----------------------------------------------------------------------------
# Parameters (deterministic, synthetic)
# ----------------------------------------------------------------------------
def init_params(key, *, res_dim0=16, hidden=32, num_queries=8, num_cls=4,
                kps_dim=8, mlp_layers=3):
    ks = jax.random.split(key, 8)
    p = {}
    p["conv1_w"] = 0.05 * jax.random.normal(ks[0], (7, 7, 3, res_dim0), jnp.float32)
    # FrozenBatchNorm2d buffers exactly as registered in __init__
    p["bn1"] = (jnp.ones((res_dim0,), jnp.float32), jnp.zeros((res_dim0,), jnp.float32),
                jnp.zeros((res_dim0,), jnp.float32), jnp.ones((res_dim0,), jnp.float32))
    p["query_embed"] = 0.1 * jax.random.normal(ks[1], (num_queries, hidden), jnp.float32)
    p["input_proj_w"] = 0.05 * jax.random.normal(ks[2], (res_dim0, hidden), jnp.float32)
    p["input_proj_b"] = jnp.zeros((hidden,), jnp.float32)
    p["class_w"] = 0.05 * jax.random.normal(ks[3], (hidden, num_cls + 1), jnp.float32)
    p["class_b"] = jnp.zeros((num_cls + 1,), jnp.float32)

    def mlp_params(kk, in_d, hid, out_d, nl):
        dims = [in_d] + [hid] * (nl - 1) + [out_d]
        kks = jax.random.split(kk, nl)
        return [(0.05 * jax.random.normal(kks[i], (dims[i], dims[i + 1]), jnp.float32),
                 jnp.zeros((dims[i + 1],), jnp.float32)) for i in range(nl)]

    p["bbox_mlp"] = mlp_params(ks[4], hidden, hidden, kps_dim - 4, mlp_layers)
    p["scene_mlp"] = mlp_params(ks[5], hidden, hidden, 4, mlp_layers)
    return p


# ----------------------------------------------------------------------------
# kp forward (equivalent of kp._train / kp._test)
# ----------------------------------------------------------------------------
def kp_forward(params, images_nchw, masks_nchw, *, dec_layers=2, aux_loss=True):
    B = images_nchw.shape[0]
    x = jnp.transpose(images_nchw, (0, 2, 3, 1))            # NCHW -> NHWC

    # conv1 + bn1 + relu fused into one M-tiled Pallas matmul kernel
    bn_scale, bn_bias = frozen_bn_affine(*params["bn1"])
    p = conv2d_bn_relu_pallas(x, params["conv1_w"], bn_scale, bn_bias,
                              stride=2, pad=3, relu=True)
    # maxpool 3x3 / stride 2 / pad 1 (phase-split reduction in Pallas)
    p = pallas_maxpool2d_3x3_s2_p1(p)

    # TODO(synk): layer1..layer4 use a `block` class not provided in the reference;
    #             left as identity pass-through (res_dims chosen equal so channels match).
    Hp, Wp, Cp = p.shape[1], p.shape[2], p.shape[3]

    # pmasks = nearest-resize of masks to p's spatial size (only feeds the transformer).
    pmasks = jax.image.resize(masks_nchw[:, 0].astype(jnp.float32),
                              (B, Hp, Wp), method="nearest").astype(bool)
    del pmasks  # unused by the surrogate decoder below
    # TODO(synk): build_position_encoding is not provided; positional encoding omitted.

    # input_proj: 1x1 conv == per-pixel matmul over channels (tiled Pallas kernel, bias-only epilogue)
    mem = pallas_matmul_affine(p.reshape(B * Hp * Wp, Cp),
                               params["input_proj_w"], params["input_proj_b"])
    hidden = mem.shape[-1]
    mem = mem.reshape(B, Hp * Wp, hidden)

    # TODO(synk): build_transformer (DETR encoder/decoder) source is not provided; using a
    #             clearly-marked surrogate hs = query_embed + global-mean(memory), and weights=None.
    Q = params["query_embed"].shape[0]
    pooled = jnp.mean(mem, axis=1)                                        # (B, hidden)
    hs = params["query_embed"][None, None] + pooled[None, :, None, :]     # (1,B,Q,hidden)
    hs = jnp.broadcast_to(hs, (dec_layers, B, Q, hidden))
    weights = None

    # heads: class Linear + bbox MLP + scene MLP fused into ONE Pallas kernel
    hs2d = hs.reshape(dec_layers * B * Q, hidden)
    cls2d, bbox2d, scene2d = pallas_fused_heads(
        hs2d, params["class_w"], params["class_b"],
        params["bbox_mlp"], params["scene_mlp"])
    output_class = cls2d.reshape(dec_layers, B, Q, -1)
    output_coord = bbox2d.reshape(dec_layers, B, Q, -1)
    output_scene = scene2d.reshape(dec_layers, B, Q, -1)

    # scene mean over queries, repeat, concat into coords (matches torch glue exactly)
    output_scene = jnp.mean(output_scene, axis=-2, keepdims=True)
    output_scene = jnp.broadcast_to(output_scene, (dec_layers, B, Q, output_scene.shape[-1]))
    output_coord = jnp.concatenate(
        [output_coord[..., :2], output_scene, output_coord[..., 2:]], axis=-1)

    out = {"pred_logits": output_class[-1], "pred_boxes": output_coord[-1]}
    if aux_loss:
        out["aux_outputs"] = [{"pred_logits": a, "pred_boxes": b}
                              for a, b in zip(output_class[:-1], output_coord[:-1])]
    return out, weights


# ----------------------------------------------------------------------------
if __name__ == "__main__":
    key = jax.random.PRNGKey(0)
    k_img, k_mask, k_par = jax.random.split(key, 3)

    images = jax.random.normal(k_img, (2, 3, 32, 32), jnp.float32)          # NCHW
    masks = (jax.random.uniform(k_mask, (2, 1, 32, 32)) > 0.5).astype(jnp.float32)

    params = init_params(k_par, res_dim0=16, hidden=32, num_queries=8,
                         num_cls=4, kps_dim=8, mlp_layers=3)

    out, weights = kp_forward(params, images, masks, dec_layers=2, aux_loss=True)
    jax.block_until_ready(out)

    assert out["pred_logits"].shape == (2, 8, 5)
    assert out["pred_boxes"].shape == (2, 8, 8)
    print("KERNEL_OK")
</pallas_src>

<mosaic_0001>
module attributes {stable_mosaic.version = 11 : i64} {
  func.func @_mm_epilogue_kernel(%arg0: i32, %arg1: memref<256x147xbf16, #tpu.memory_space<vmem>>, %arg2: memref<147x16xbf16, #tpu.memory_space<vmem>>, %arg3: memref<1x16xf32, #tpu.memory_space<vmem>>, %arg4: memref<1x16xf32, #tpu.memory_space<vmem>>, %arg5: memref<256x16xf32, #tpu.memory_space<vmem>>) attributes {dimension_semantics = [#tpu.dimension_semantics<parallel>], iteration_bounds = array<i64: 2>, scalar_prefetch = 0 : i64, scratch_operands = 0 : i64, tpu.core_type = #tpu.core_type<tc>, window_params = [{transform_indices = @transform_0, window_bounds = array<i64: 256, 147>}, {pipeline_mode = #tpu.pipeline_mode<synchronous>, transform_indices = @transform_1, window_bounds = array<i64: 147, 16>}, {pipeline_mode = #tpu.pipeline_mode<synchronous>, transform_indices = @transform_2, window_bounds = array<i64: 1, 16>}, {pipeline_mode = #tpu.pipeline_mode<synchronous>, transform_indices = @transform_3, window_bounds = array<i64: 1, 16>}, {transform_indices = @transform_4, window_bounds = array<i64: 256, 16>}]} {
    %c0 = arith.constant 0 : index
    %c0_0 = arith.constant 0 : index
    %0 = vector.load %arg1[%c0, %c0_0] : memref<256x147xbf16, #tpu.memory_space<vmem>>, vector<256x147xbf16>
    %c0_1 = arith.constant 0 : index
    %c0_2 = arith.constant 0 : index
    %1 = vector.load %arg2[%c0_1, %c0_2] : memref<147x16xbf16, #tpu.memory_space<vmem>>, vector<147x16xbf16>
    %cst = arith.constant dense<0.000000e+00> : vector<256x16xf32>
    %2 = tpu.matmul %0, %1, %cst {dimension_numbers = #tpu.dot_dimension_numbers<[1], [0], [0], [1], [0, 0, 1, 1], [], []>} : vector<256x147xbf16>, vector<147x16xbf16>, vector<256x16xf32> -> vector<256x16xf32>
    %c0_3 = arith.constant 0 : index
    %c0_4 = arith.constant 0 : index
    %3 = vector.load %arg3[%c0_3, %c0_4] : memref<1x16xf32, #tpu.memory_space<vmem>>, vector<1x16xf32>
    %4 = vector.broadcast %3 : vector<1x16xf32> to vector<256x16xf32>
    %5 = arith.mulf %2, %4 : vector<256x16xf32>
    %c0_5 = arith.constant 0 : index
    %c0_6 = arith.constant 0 : index
    %6 = vector.load %arg4[%c0_5, %c0_6] : memref<1x16xf32, #tpu.memory_space<vmem>>, vector<1x16xf32>
    %7 = vector.broadcast %6 : vector<1x16xf32> to vector<256x16xf32>
    %8 = arith.addf %5, %7 : vector<256x16xf32>
    %cst_7 = arith.constant 0.000000e+00 : f32
    %9 = vector.broadcast %cst_7 : f32 to vector<256x16xf32>
    %10 = arith.maximumf %8, %9 : vector<256x16xf32>
    %c0_8 = arith.constant 0 : index
    %c0_9 = arith.constant 0 : index
    %11 = vector.load %arg5[%c0_8, %c0_9] : memref<256x16xf32, #tpu.memory_space<vmem>>, vector<256x16xf32>
    tpu.vector_store %arg5[%c0_8, %c0_9], %10 {strides = array<i32>} : memref<256x16xf32, #tpu.memory_space<vmem>>, vector<256x16xf32>,
    return
  }
  func.func @transform_0(%arg0: i32) -> (i32, i32) {
    %c0_i32 = arith.constant 0 : i32
    %c0_i32_0 = arith.constant 0 : i32
    return %arg0, %c0_i32 : i32, i32
  }
  func.func @transform_1(%arg0: i32) -> (i32, i32) {
    %c0_i32 = arith.constant 0 : i32
    %c0_i32_0 = arith.constant 0 : i32
    %c0_i32_1 = arith.constant 0 : i32
    return %c0_i32, %c0_i32_0 : i32, i32
  }
  func.func @transform_2(%arg0: i32) -> (i32, i32) {
    %c0_i32 = arith.constant 0 : i32
    %c0_i32_0 = arith.constant 0 : i32
    %c0_i32_1 = arith.constant 0 : i32
    return %c0_i32, %c0_i32_0 : i32, i32
  }
  func.func @transform_3(%arg0: i32) -> (i32, i32) {
    %c0_i32 = arith.constant 0 : i32
    %c0_i32_0 = arith.constant 0 : i32
    %c0_i32_1 = arith.constant 0 : i32
    return %c0_i32, %c0_i32_0 : i32, i32
  }
  func.func @transform_4(%arg0: i32) -> (i32, i32) {
    %c0_i32 = arith.constant 0 : i32
    %c0_i32_0 = arith.constant 0 : i32
    return %arg0, %c0_i32 : i32, i32
  }
}

</mosaic_0001>

<llo_original>
// kernel: tpu_custom_call.1
$region0: #{tpu_custom_call.1}
  #allocation0 [shape = 'u32[]', space=smem, size = 0x4, offset = 0x4, fixed_abs, tag = 'smem constant byte address 0x4 - core index']
  #allocation1 [shape = 'u32[144,128]{1,0:T(1,128)}', space=vmem, size = 0x12000, scoped, tag = 'internal scratch']
  %s0 = inlined_call_operand.vmem [shape: bf16[512,147], index: 0, kind: input, shape index: {}]
  %s1 = inlined_call_operand.vmem [shape: bf16[147,16], index: 1, kind: input, shape index: {}]
  %s2 = inlined_call_operand.vmem [shape: f32[1,16], index: 2, kind: input, shape index: {}]
  %s3 = inlined_call_operand.vmem [shape: f32[1,16], index: 3, kind: input, shape index: {}]
  %s4 = inlined_call_operand.vmem [shape: f32[512,16], index: 4, kind: output, shape index: {}]
  %s5 = sld [smem:[#allocation0]]
  $region49: #{tpu_custom_call.1} parent=0
    _
  %s7 = ssub.s32 1, %s5
  %s8 = scalar_select 0, %s7, %s5
  loop: start=0, step=1, limit=4
  $region2: #{tpu_custom_call.1} parent=0 // loop_pre_header
    _
  $region3: #{tpu_custom_call.1} parent=0 // loop_header
    %s10 = sphi 0, %s14
    %p11 = scmp.ge.s32.totalorder %s10, 4
    %s20 = sphi 0, %s22
    %s23 = sphi 0, %s20
    %s24 = sphi 0, %s23
    %s40 = sphi 0, %s24
    %s44 = sphi 0, %s44
    %s46 = sphi 0, %s44
    %s47 = sphi 0, %s46
    %s61 = sphi 0, %s47
    %s65 = sphi 0, %s65
    %s67 = sphi 0, %s65
    %s68 = sphi 0, %s67
    %s82 = sphi 0, %s68
    %s86 = sphi 0, %s86
    %s88 = sphi 0, %s86
    %s89 = sphi 0, %s88
    %s103 = sphi 0, %s89
    %s109 = sphi 0, %s111
    %s112 = sphi 0, %s109
    %s113 = sphi 0, %s112
    %s129 = sphi 0, %s113
  $region4: #{tpu_custom_call.1} parent=0 // loop_header_branch
    %13 = sbr.rel (%p11) target = $region8
  $region5: #{tpu_custom_call.1} parent=0 // loop_body
    %s15 = ssub.s32 %s10, 1
    %s16 = ssub.s32 %s10, 2
    %s17 = sadd.s32 %s10, 1
    %s18 = ssub.s32 %s10, %s17
    %p19 = scmp.eq.s32.totalorder %s18, 0
    %s21 = sadd.s32 %s20, 1
    %s22 = scalar_select %p19, %s20, %s21
    %p25 = pneg %p19
    %p26 = scmp.eq.s32.totalorder %s10, 1
    %p27 = por %p25, %p26
    %p28 = scmp.ne.s32.totalorder %s20, %s23
    %p29 = scmp.eq.s32.totalorder %s10, 0
    %p30 = por %p28, %p29
    %p31 = scmp.ne.s32.totalorder %s20, %s23
    %p32 = scmp.eq.s32.totalorder %s15, 1
    %p33 = por %p31, %p32
    %p34 = scmp.ne.s32.totalorder %s23, %s24
    %p35 = scmp.eq.s32.totalorder %s15, 0
    %p36 = por %p34, %p35
    %p37 = scmp.ne.s32.totalorder %s23, %s24
    %p38 = scmp.eq.s32.totalorder %s16, 1
    %p39 = por %p37, %p38
    %p41 = scmp.ne.s32.totalorder %s24, %s40
    %p42 = scmp.eq.s32.totalorder %s16, 0
    %p43 = por %p41, %p42
    %s45 = sadd.s32 %s44, 1
    %p48 = scmp.eq.s32.totalorder %s10, 1
    %p49 = scmp.ne.s32.totalorder %s44, %s46
    %p50 = scmp.eq.s32.totalorder %s10, 0
    %p51 = por %p49, %p50
    %p52 = scmp.ne.s32.totalorder %s44, %s46
    %p53 = scmp.eq.s32.totalorder %s15, 1
    %p54 = por %p52, %p53
    %p55 = scmp.ne.s32.totalorder %s46, %s47
    %p56 = scmp.eq.s32.totalorder %s15, 0
    %p57 = por %p55, %p56
    %p58 = scmp.ne.s32.totalorder %s46, %s47
    %p59 = scmp.eq.s32.totalorder %s16, 1
    %p60 = por %p58, %p59
    %p62 = scmp.ne.s32.totalorder %s47, %s61
    %p63 = scmp.eq.s32.totalorder %s16, 0
    %p64 = por %p62, %p63
    %s66 = sadd.s32 %s65, 1
    %p69 = scmp.eq.s32.totalorder %s10, 1
    %p70 = scmp.ne.s32.totalorder %s65, %s67
    %p71 = scmp.eq.s32.totalorder %s10, 0
    %p72 = por %p70, %p71
    %p73 = scmp.ne.s32.totalorder %s65, %s67
    %p74 = scmp.eq.s32.totalorder %s15, 1
    %p75 = por %p73, %p74
    %p76 = scmp.ne.s32.totalorder %s67, %s68
    %p77 = scmp.eq.s32.totalorder %s15, 0
    %p78 = por %p76, %p77
    %p79 = scmp.ne.s32.totalorder %s67, %s68
    %p80 = scmp.eq.s32.totalorder %s16, 1
    %p81 = por %p79, %p80
    %p83 = scmp.ne.s32.totalorder %s68, %s82
    %p84 = scmp.eq.s32.totalorder %s16, 0
    %p85 = por %p83, %p84
    %s87 = sadd.s32 %s86, 1
    %p90 = scmp.eq.s32.totalorder %s10, 1
    %p91 = scmp.ne.s32.totalorder %s86, %s88
    %p92 = scmp.eq.s32.totalorder %s10, 0
    %p93 = por %p91, %p92
    %p94 = scmp.ne.s32.totalorder %s86, %s88
    %p95 = scmp.eq.s32.totalorder %s15, 1
    %p96 = por %p94, %p95
    %p97 = scmp.ne.s32.totalorder %s88, %s89
    %p98 = scmp.eq.s32.totalorder %s15, 0
    %p99 = por %p97, %p98
    %p100 = scmp.ne.s32.totalorder %s88, %s89
    %p101 = scmp.eq.s32.totalorder %s16, 1
    %p102 = por %p100, %p101
    %p104 = scmp.ne.s32.totalorder %s89, %s103
    %p105 = scmp.eq.s32.totalorder %s16, 0
    %p106 = por %p104, %p105
    %s107 = ssub.s32 %s10, %s17
    %p108 = scmp.eq.s32.totalorder %s107, 0
    %s110 = sadd.s32 %s109, 1
    %s111 = scalar_select %p108, %s109, %s110
    %p114 = pneg %p108
    %p115 = scmp.eq.s32.totalorder %s10, 1
    %p116 = por %p114, %p115
    %p117 = scmp.ne.s32.totalorder %s109, %s112
    %p118 = scmp.eq.s32.totalorder %s10, 0
    %p119 = por %p117, %p118
    %p120 = scmp.ne.s32.totalorder %s109, %s112
    %p121 = scmp.eq.s32.totalorder %s15, 1
    %p122 = por %p120, %p121
    %p123 = scmp.ne.s32.totalorder %s112, %s113
    %p124 = scmp.eq.s32.totalorder %s15, 0
    %p125 = por %p123, %p124
    %p126 = scmp.ne.s32.totalorder %s112, %s113
    %p127 = scmp.eq.s32.totalorder %s16, 1
    %p128 = por %p126, %p127
    %p130 = scmp.ne.s32.totalorder %s113, %s129
    %p131 = scmp.eq.s32.totalorder %s16, 0
    %p132 = por %p130, %p131
    %p133 = scmp.le.s32.totalorder 1, %s10
    %p134 = scmp.lt.s32.totalorder %s10, 3
    %p135 = pnand %p133, %p134
    %p136 = pneg %p135
    // Predicated region
    $region9: #{tpu_custom_call.1} parent=5 // pred_check
      _
    $region10: #{tpu_custom_call.1} parent=5 // pred_check_branch
      %138 = sbr.rel (%p135) target = $region12
    $region11: #{tpu_custom_call.1} parent=5 // pred_region
      %s139 = ssub.s32 %s10, 1
      // Predicated region
      $region13: #{tpu_custom_call.1} parent=11 // pred_check
        %p140 = pneg %p57
      $region14: #{tpu_custom_call.1} parent=11 // pred_check_branch
        %142 = sbr.rel (%p140) target = $region16
      $region15: #{tpu_custom_call.1} parent=11 // pred_region
        _
      $region16: #{tpu_custom_call.1} parent=11 // pred_fallthru
        _
      // Predicated region
      $region17: #{tpu_custom_call.1} parent=11 // pred_check
        %p143 = pneg %p78
      $region18: #{tpu_custom_call.1} parent=11 // pred_check_branch
        %145 = sbr.rel (%p143) target = $region20
      $region19: #{tpu_custom_call.1} parent=11 // pred_region
        _
      $region20: #{tpu_custom_call.1} parent=11 // pred_fallthru
        _
      // Predicated region
      $region21: #{tpu_custom_call.1} parent=11 // pred_check
        %p146 = pneg %p99
      $region22: #{tpu_custom_call.1} parent=11 // pred_check_branch
        %148 = sbr.rel (%p146) target = $region24
      $region23: #{tpu_custom_call.1} parent=11 // pred_region
        _
      $region24: #{tpu_custom_call.1} parent=11 // pred_fallthru
        _
    $region12: #{tpu_custom_call.1} parent=5 // pred_fallthru
      _
    %p149 = scmp.lt.s32.totalorder %s10, 2
    // Predicated region
    $region25: #{tpu_custom_call.1} parent=5 // pred_check
      %p150 = pneg %p149
    $region26: #{tpu_custom_call.1} parent=5 // pred_check_branch
      %152 = sbr.rel (%p150) target = $region28
    $region27: #{tpu_custom_call.1} parent=5 // pred_region
      // Predicated region
      $region29: #{tpu_custom_call.1} parent=27 // pred_check
        %p153 = pneg %p30
      $region30: #{tpu_custom_call.1} parent=27 // pred_check_branch
        %155 = sbr.rel (%p153) target = $region32
      $region31: #{tpu_custom_call.1} parent=27 // pred_region
        %s156 = smul.u32 32, %s10
        %p157 = scmp.lt.s32.totalorder %s156, 63
        %s158 = scalar_select %p157, %s156, 63
        %s159 = smul.addr %s158, 2
        %s160 = smul.addr %s159, 4
        %s161 = scalar_lea.vmem %s0, %s160
        %s162 = smul.u32 32, %s10
      $region32: #{tpu_custom_call.1} parent=27 // pred_fallthru
        _
    $region28: #{tpu_custom_call.1} parent=5 // pred_fallthru
      _
    %p163 = scmp.le.s32.totalorder 1, %s10
    %p164 = scmp.lt.s32.totalorder %s10, 3
    %p165 = pnand %p163, %p164
    %p166 = pneg %p165
    // Predicated region
    $region33: #{tpu_custom_call.1} parent=5 // pred_check
      _
    $region34: #{tpu_custom_call.1} parent=5 // pred_check_branch
      %168 = sbr.rel (%p165) target = $region36
    $region35: #{tpu_custom_call.1} parent=5 // pred_region
      %s169 = ssub.s32 %s10, 1
      %s170 = smul.u32 32, %s15
      %p171 = scmp.lt.s32.totalorder %s170, 63
      %s172 = scalar_select %p171, %s170, 63
      %s173 = smul.addr %s172, 2
      %s174 = smul.addr %s173, 4
      %s175 = scalar_lea.vmem %s0, %s174
      %p176 = pneg %p36
      %p177 = pneg %p33
      %p178 = pneg %p57
      %p179 = pneg %p54
      %p180 = pneg %p78
      %p181 = pneg %p75
      %p182 = pneg %p99
      %p183 = pneg %p96
      %p184 = pneg %p125
      %p185 = pneg %p122
      %s186 = smul.u32 32, %s15
      %p187 = scmp.lt.s32.totalorder %s186, 63
      %s188 = scalar_select %p187, %s186, 63
      %s189 = smul.addr %s188, 8
      %s190 = scalar_lea.vmem %s4, %s189
      %s191 = smul.u32 32, %s15
      %p192 = scmp.lt.s32.totalorder %s191, 63
      %s193 = scalar_select %p192, %s191, 63
      %s194 = smul.addr %s193, 2
      %s195 = smul.addr %s194, 4
      %s196 = scalar_lea.vmem %s0, %s195
      %s197 = smul.u32 32, %s15
      %s198 = smul.u32 32, %s15
      %p199 = scmp.lt.s32.totalorder %s198, 63
      %s200 = scalar_select %p199, %s198, 63
      %s201 = smul.addr %s200, 8
      %s202 = scalar_lea.vmem %s4, %s201
      %s203 = smul.u32 32, %s15
      %v205 = vld [vmem:[%s196] sm:$0xff]
      %v206 = vld [vmem:[%s196 + $0x8] sm:$0xff]
      %v207 = vld [vmem:[%s196 + $0x10] sm:$0xff]
      %v208 = vld [vmem:[%s196 + $0x18] sm:$0xff]
      %v209 = vld [vmem:[%s196 + $0x20] sm:$0xff]
      %v210 = vld [vmem:[%s196 + $0x28] sm:$0xff]
      %v211 = vld [vmem:[%s196 + $0x30] sm:$0xff]
      %v212 = vld [vmem:[%s196 + $0x38] sm:$0xff]
      %v213 = vld [vmem:[%s196 + $0x40] sm:$0xff]
      %v214 = vld [vmem:[%s196 + $0x48] sm:$0xff]
      %v215 = vld [vmem:[%s196 + $0x50] sm:$0xff]
      %v216 = vld [vmem:[%s196 + $0x58] sm:$0xff]
      %v217 = vld [vmem:[%s196 + $0x60] sm:$0xff]
      %v218 = vld [vmem:[%s196 + $0x68] sm:$0xff]
      %v219 = vld [vmem:[%s196 + $0x70] sm:$0xff]
      %v220 = vld [vmem:[%s196 + $0x78] sm:$0xff]
      %v221 = vld [vmem:[%s196 + $0x80] sm:$0xff]
      %v222 = vld [vmem:[%s196 + $0x88] sm:$0xff]
      %v223 = vld [vmem:[%s196 + $0x90] sm:$0xff]
      %v224 = vld [vmem:[%s196 + $0x98] sm:$0xff]
      %v225 = vld [vmem:[%s196 + $0xa0] sm:$0xff]
      %v226 = vld [vmem:[%s196 + $0xa8] sm:$0xff]
      %v227 = vld [vmem:[%s196 + $0xb0] sm:$0xff]
      %v228 = vld [vmem:[%s196 + $0xb8] sm:$0xff]
      %v229 = vld [vmem:[%s196 + $0xc0] sm:$0xff]
      %v230 = vld [vmem:[%s196 + $0xc8] sm:$0xff]
      %v231 = vld [vmem:[%s196 + $0xd0] sm:$0xff]
      %v232 = vld [vmem:[%s196 + $0xd8] sm:$0xff]
      %v233 = vld [vmem:[%s196 + $0xe0] sm:$0xff]
      %v234 = vld [vmem:[%s196 + $0xe8] sm:$0xff]
      %v235 = vld [vmem:[%s196 + $0xf0] sm:$0xff]
      %v236 = vld [vmem:[%s196 + $0xf8] sm:$0xff]
      %v237 = vld [vmem:[%s1] sm:$0xf]
      %v238 = vld [vmem:[%s1 + $0x4] sm:$0xf]
      %v239 = vld [vmem:[%s1 + $0x8] sm:$0xf]
      %v240 = vld [vmem:[%s1 + $0xc] sm:$0xf]
      %v241 = vld [vmem:[%s1 + $0x10] sm:$0xf]
      %v242 = vld [vmem:[%s1 + $0x14] sm:$0xf]
      %v243 = vld [vmem:[%s1 + $0x18] sm:$0xf]
      %v244 = vld [vmem:[%s1 + $0x1c] sm:$0xf]
      %v245 = vld [vmem:[%s1 + $0x20] sm:$0xf]
      %v246 = vld [vmem:[%s1 + $0x24] sm:$0xf]
      %v247 = vld [vmem:[%s1 + $0x28] sm:$0xf]
      %v248 = vld [vmem:[%s1 + $0x2c] sm:$0xf]
      %v249 = vld [vmem:[%s1 + $0x30] sm:$0xf]
      %v250 = vld [vmem:[%s1 + $0x34] sm:$0xf]
      %v251 = vld [vmem:[%s1 + $0x38] sm:$0xf]
      %v252 = vld [vmem:[%s1 + $0x3c] sm:$0xf]
      %v253 = vld [vmem:[%s1 + $0x40] sm:$0xf]
      %v254 = vld [vmem:[%s1 + $0x44] sm:$0xf]
      %v255 = vld [vmem:[%s1 + $0x48] sm:$0x3]
      %v288 = vunpack.c.l.b16 %v205
      %v289 = vunpack.c.h.b16 %v205
      %v290 = vunpack.c.l.b16 %v206
      %v291 = vunpack.c.h.b16 %v206
      %v292 = vunpack.c.l.b16 %v207
      %v293 = vunpack.c.h.b16 %v207
      %v294 = vunpack.c.l.b16 %v208
      %v295 = vunpack.c.h.b16 %v208
      %v296 = vunpack.c.l.b16 %v209
      %v297 = vunpack.c.h.b16 %v209
      %v298 = vunpack.c.l.b16 %v210
      %v299 = vunpack.c.h.b16 %v210
      %v300 = vunpack.c.l.b16 %v211
      %v301 = vunpack.c.h.b16 %v211
      %v302 = vunpack.c.l.b16 %v212
      %v303 = vunpack.c.h.b16 %v212
      %v304 = vunpack.c.l.b16 %v213
      %v305 = vunpack.c.h.b16 %v213
      %v306 = vunpack.c.l.b16 %v214
      %v307 = vunpack.c.h.b16 %v214
      %v308 = vunpack.c.l.b16 %v215
      %v309 = vunpack.c.h.b16 %v215
      %v310 = vunpack.c.l.b16 %v216
      %v311 = vunpack.c.h.b16 %v216
      %v312 = vunpack.c.l.b16 %v217
      %v313 = vunpack.c.h.b16 %v217
      %v314 = vunpack.c.l.b16 %v218
      %v315 = vunpack.c.h.b16 %v218
      %v316 = vunpack.c.l.b16 %v219
      %v317 = vunpack.c.h.b16 %v219
      %v318 = vunpack.c.l.b16 %v220
      %v319 = vunpack.c.h.b16 %v220
      %v320 = vunpack.c.l.b16 %v221
      %v321 = vunpack.c.h.b16 %v221
      %v322 = vunpack.c.l.b16 %v222
      %v323 = vunpack.c.h.b16 %v222
      %v324 = vunpack.c.l.b16 %v223
      %v325 = vunpack.c.h.b16 %v223
      %v326 = vunpack.c.l.b16 %v224
      %v327 = vunpack.c.h.b16 %v224
      %v328 = vunpack.c.l.b16 %v225
      %v329 = vunpack.c.h.b16 %v225
      %v330 = vunpack.c.l.b16 %v226
      %v331 = vunpack.c.h.b16 %v226
      %v332 = vunpack.c.l.b16 %v227
      %v333 = vunpack.c.h.b16 %v227
      %v334 = vunpack.c.l.b16 %v228
      %v335 = vunpack.c.h.b16 %v228
      %v336 = vunpack.c.l.b16 %v229
      %v337 = vunpack.c.h.b16 %v229
      %v338 = vunpack.c.l.b16 %v230
      %v339 = vunpack.c.h.b16 %v230
      %v340 = vunpack.c.l.b16 %v231
      %v341 = vunpack.c.h.b16 %v231
      %v342 = vunpack.c.l.b16 %v232
      %v343 = vunpack.c.h.b16 %v232
      %v344 = vunpack.c.l.b16 %v233
      %v345 = vunpack.c.h.b16 %v233
      %v346 = vunpack.c.l.b16 %v234
      %v347 = vunpack.c.h.b16 %v234
      %v348 = vunpack.c.l.b16 %v235
      %v349 = vunpack.c.h.b16 %v235
      %v350 = vunpack.c.l.b16 %v236
      %v351 = vunpack.c.h.b16 %v236
      %v352 = vpack.c.b16 %v290, %v288
      %v353 = vpack.c.b16 %v291, %v289
      %v354 = vpack.c.b16 %v294, %v292
      %v355 = vpack.c.b16 %v295, %v293
      %v356 = vpack.c.b16 %v298, %v296
      %v357 = vpack.c.b16 %v299, %v297
      %v358 = vpack.c.b16 %v302, %v300
      %v359 = vpack.c.b16 %v303, %v301
      %v360 = vpack.c.b16 %v306, %v304
      %v361 = vpack.c.b16 %v307, %v305
      %v362 = vpack.c.b16 %v310, %v308
      %v363 = vpack.c.b16 %v311, %v309
      %v364 = vpack.c.b16 %v314, %v312
      %v365 = vpack.c.b16 %v315, %v313
      %v366 = vpack.c.b16 %v318, %v316
      %v367 = vpack.c.b16 %v319, %v317
      %v368 = vpack.c.b16 %v322, %v320
      %v369 = vpack.c.b16 %v323, %v321
      %v370 = vpack.c.b16 %v326, %v324
      %v371 = vpack.c.b16 %v327, %v325
      %v372 = vpack.c.b16 %v330, %v328
      %v373 = vpack.c.b16 %v331, %v329
      %v374 = vpack.c.b16 %v334, %v332
      %v375 = vpack.c.b16 %v335, %v333
      %v376 = vpack.c.b16 %v338, %v336
      %v377 = vpack.c.b16 %v339, %v337
      %v378 = vpack.c.b16 %v342, %v340
      %v379 = vpack.c.b16 %v343, %v341
      %v380 = vpack.c.b16 %v346, %v344
      %v381 = vpack.c.b16 %v347, %v345
      %v382 = vpack.c.b16 %v350, %v348
      %v383 = vpack.c.b16 %v351, %v349
      %v419 = vunpack.c.l.b16 %v237
      %v420 = vunpack.c.l.b16 %v238
      %v421 = vunpack.c.l.b16 %v239
      %v422 = vunpack.c.l.b16 %v240
      %v423 = vunpack.c.l.b16 %v241
      %v424 = vunpack.c.l.b16 %v242
      %v425 = vunpack.c.l.b16 %v243
      %v426 = vunpack.c.l.b16 %v244
      %v427 = vunpack.c.l.b16 %v245
      %v428 = vunpack.c.l.b16 %v246
      %v429 = vunpack.c.l.b16 %v247
      %v430 = vunpack.c.l.b16 %v248
      %v431 = vunpack.c.l.b16 %v249
      %v432 = vunpack.c.l.b16 %v250
      %v433 = vunpack.c.l.b16 %v251
      %v434 = vunpack.c.l.b16 %v252
      %v435 = vunpack.c.l.b16 %v253
      %v436 = vunpack.c.l.b16 %v254
      %v437 = vunpack.c.l.b16 %v255
      %v438 = vpack.c.b16 %v420, %v419
      %v439 = vpack.c.b16 %v422, %v421
      %v440 = vpack.c.b16 %v424, %v423
      %v441 = vpack.c.b16 %v426, %v425
      %v442 = vpack.c.b16 %v428, %v427
      %v443 = vpack.c.b16 %v430, %v429
      %v444 = vpack.c.b16 %v432, %v431
      %v445 = vpack.c.b16 %v434, %v433
      %v446 = vpack.c.b16 %v436, %v435
      %v447 = vpack.c.b16 %v437, %v437
      %vm457 = vcmask 154624
      %v459 = vsel %vm457, %v353, 0
      %v462 = vsel %vm457, %v355, 0
      %v465 = vsel %vm457, %v357, 0
      %v468 = vsel %vm457, %v359, 0
      %v471 = vsel %vm457, %v361, 0
      %v474 = vsel %vm457, %v363, 0
      %v477 = vsel %vm457, %v365, 0
      %v480 = vsel %vm457, %v367, 0
      %v483 = vsel %vm457, %v369, 0
      %v486 = vsel %vm457, %v371, 0
      %v489 = vsel %vm457, %v373, 0
      %v492 = vsel %vm457, %v375, 0
      %v495 = vsel %vm457, %v377, 0
      %v498 = vsel %vm457, %v379, 0
      %v501 = vsel %vm457, %v381, 0
      %v504 = vsel %vm457, %v383, 0
      %vm506 = vcmask 1040384
      %vm507 = vcmask 1041408
      %v508 = vsel %vm506, 4294967295, 65535
      %v509 = vsel %vm507, %v508, 0
      %v511 = vand.u32 %v447, %v509
      %513 = vmatprep.subr.bf16.mxu0 0
      %514 = vmatpush1.bf16.msra.mxu0 %v445
      %515 = vmatprep.subr.bf16.mxu0 0
      %516 = vmatpush1.bf16.msra.mxu0 %v444
      %517 = vmatprep.subr.bf16.mxu0 0
      %518 = vmatpush1.bf16.msra.mxu0 %v443
      %519 = vmatprep.subr.bf16.mxu0 0
      %520 = vmatpush1.bf16.msra.mxu0 %v442
      %521 = vmatprep.subr.bf16.mxu0 0
      %522 = vmatpush1.bf16.msra.mxu0 %v441
      %523 = vmatprep.subr.bf16.mxu0 0
      %524 = vmatpush1.bf16.msra.mxu0 %v440
      %525 = vmatprep.subr.bf16.mxu0 0
      %526 = vmatpush1.bf16.msra.mxu0 %v439
      %527 = vmatprep.subr.bf16.mxu0 0
      %528 = vmatpush1.bf16.msra.mxu0 %v438
      %529 = vmatprep.subr.bf16.mxu0 0
      %530 = vmatpush2.bf16.msra.mxu0 0
      %531 = vmatprep.subr.bf16.mxu0 0
      %532 = vmatpush2.bf16.msra.mxu0 0
      %533 = vmatprep.subr.bf16.mxu0 0
      %534 = vmatpush2.bf16.msra.mxu0 0
      %535 = vmatprep.subr.bf16.mxu0 0
      %536 = vmatpush2.bf16.msra.mxu0 0
      %537 = vmatprep.subr.bf16.mxu0 0
      %538 = vmatpush2.bf16.msra.mxu0 0
      %539 = vmatprep.subr.bf16.mxu0 0
      %540 = vmatpush2.bf16.msra.mxu0 0
      %541 = vmatprep.subr.bf16.mxu0 0
      %542 = vmatpush2.bf16.msra.mxu0 %v511
      %543 = vmatprep.subr.bf16.mxu0 0
      %544 = vmatpush2.bf16.msra.mxu0 %v446
      %545 = vmatprep.mubr.bf16.mxu0 %v459
      %546 = vmatmul.mubr.bf16.gmra.mxu0 %v352
      %v547 = vpop.f32.mrf.mxu0
      %v548 = vadd.f32 0.0, %v547
      %v549 = vpop.f32.mrf.mxu0
      %v550 = vpop.f32.mrf.mxu0
      %v551 = vadd.f32 0.0, %v550
      %v552 = vpop.f32.mrf.mxu0
      %553 = vmatprep.mubr.bf16.mxu0 %v462
      %554 = vmatmul.mubr.bf16.gmra.mxu0 %v354
      %v555 = vpop.f32.mrf.mxu0
      %v556 = vadd.f32 0.0, %v555
      %v557 = vpop.f32.mrf.mxu0
      %v558 = vpop.f32.mrf.mxu0
      %v559 = vadd.f32 0.0, %v558
      %v560 = vpop.f32.mrf.mxu0
      %561 = vmatprep.mubr.bf16.mxu0 %v465
      %562 = vmatmul.mubr.bf16.gmra.mxu0 %v356
      %v563 = vpop.f32.mrf.mxu0
      %v564 = vadd.f32 0.0, %v563
      %v565 = vpop.f32.mrf.mxu0
      %v566 = vpop.f32.mrf.mxu0
      %v567 = vadd.f32 0.0, %v566
      %v568 = vpop.f32.mrf.mxu0
      %569 = vmatprep.mubr.bf16.mxu0 %v468
      %570 = vmatmul.mubr.bf16.gmra.mxu0 %v358
      %v571 = vpop.f32.mrf.mxu0
      %v572 = vadd.f32 0.0, %v571
      %v573 = vpop.f32.mrf.mxu0
      %v574 = vpop.f32.mrf.mxu0
      %v575 = vadd.f32 0.0, %v574
      %v576 = vpop.f32.mrf.mxu0
      %577 = vmatprep.mubr.bf16.mxu0 %v471
      %578 = vmatmul.mubr.bf16.gmra.mxu0 %v360
      %v579 = vpop.f32.mrf.mxu0
      %v580 = vadd.f32 0.0, %v579
      %v581 = vpop.f32.mrf.mxu0
      %v582 = vpop.f32.mrf.mxu0
      %v583 = vadd.f32 0.0, %v582
      %v584 = vpop.f32.mrf.mxu0
      %585 = vmatprep.mubr.bf16.mxu0 %v474
      %586 = vmatmul.mubr.bf16.gmra.mxu0 %v362
      %v587 = vpop.f32.mrf.mxu0
      %v588 = vadd.f32 0.0, %v587
      %v589 = vpop.f32.mrf.mxu0
      %v590 = vpop.f32.mrf.mxu0
      %v591 = vadd.f32 0.0, %v590
      %v592 = vpop.f32.mrf.mxu0
      %593 = vmatprep.mubr.bf16.mxu0 %v477
      %594 = vmatmul.mubr.bf16.gmra.mxu0 %v364
      %v595 = vpop.f32.mrf.mxu0
      %v596 = vadd.f32 0.0, %v595
      %v597 = vpop.f32.mrf.mxu0
      %v598 = vpop.f32.mrf.mxu0
      %v599 = vadd.f32 0.0, %v598
      %v600 = vpop.f32.mrf.mxu0
      %601 = vmatprep.mubr.bf16.mxu0 %v480
      %602 = vmatmul.mubr.bf16.gmra.mxu0 %v366
      %v603 = vpop.f32.mrf.mxu0
      %v604 = vadd.f32 0.0, %v603
      %v605 = vpop.f32.mrf.mxu0
      %v606 = vpop.f32.mrf.mxu0
      %v607 = vadd.f32 0.0, %v606
      %v608 = vpop.f32.mrf.mxu0
      %609 = vmatprep.mubr.bf16.mxu0 %v483
      %610 = vmatmul.mubr.bf16.gmra.mxu0 %v368
      %v611 = vpop.f32.mrf.mxu0
      %v612 = vadd.f32 0.0, %v611
      %v613 = vpop.f32.mrf.mxu0
      %v614 = vpop.f32.mrf.mxu0
      %v615 = vadd.f32 0.0, %v614
      %v616 = vpop.f32.mrf.mxu0
      %617 = vmatprep.mubr.bf16.mxu0 %v486
      %618 = vmatmul.mubr.bf16.gmra.mxu0 %v370
      %v619 = vpop.f32.mrf.mxu0
      %v620 = vadd.f32 0.0, %v619
      %v621 = vpop.f32.mrf.mxu0
      %v622 = vpop.f32.mrf.mxu0
      %v623 = vadd.f32 0.0, %v622
      %v624 = vpop.f32.mrf.mxu0
      %625 = vmatprep.mubr.bf16.mxu0 %v489
      %626 = vmatmul.mubr.bf16.gmra.mxu0 %v372
      %v627 = vpop.f32.mrf.mxu0
      %v628 = vadd.f32 0.0, %v627
      %v629 = vpop.f32.mrf.mxu0
      %v630 = vpop.f32.mrf.mxu0
      %v631 = vadd.f32 0.0, %v630
      %v632 = vpop.f32.mrf.mxu0
      %633 = vmatprep.mubr.bf16.mxu0 %v492
      %634 = vmatmul.mubr.bf16.gmra.mxu0 %v374
      %v635 = vpop.f32.mrf.mxu0
      %v636 = vadd.f32 0.0, %v635
      %v637 = vpop.f32.mrf.mxu0
      %v638 = vpop.f32.mrf.mxu0
      %v639 = vadd.f32 0.0, %v638
      %v640 = vpop.f32.mrf.mxu0
      %641 = vmatprep.mubr.bf16.mxu0 %v495
      %642 = vmatmul.mubr.bf16.gmra.mxu0 %v376
      %v643 = vpop.f32.mrf.mxu0
      %v644 = vadd.f32 0.0, %v643
      %v645 = vpop.f32.mrf.mxu0
      %v646 = vpop.f32.mrf.mxu0
      %v647 = vadd.f32 0.0, %v646
      %v648 = vpop.f32.mrf.mxu0
      %649 = vmatprep.mubr.bf16.mxu0 %v498
      %650 = vmatmul.mubr.bf16.gmra.mxu0 %v378
      %v651 = vpop.f32.mrf.mxu0
      %v652 = vadd.f32 0.0, %v651
      %v653 = vpop.f32.mrf.mxu0
      %v654 = vpop.f32.mrf.mxu0
      %v655 = vadd.f32 0.0, %v654
      %v656 = vpop.f32.mrf.mxu0
      %657 = vmatprep.mubr.bf16.mxu0 %v501
      %658 = vmatmul.mubr.bf16.gmra.mxu0 %v380
      %v659 = vpop.f32.mrf.mxu0
      %v660 = vadd.f32 0.0, %v659
      %v661 = vpop.f32.mrf.mxu0
      %v662 = vpop.f32.mrf.mxu0
      %v663 = vadd.f32 0.0, %v662
      %v664 = vpop.f32.mrf.mxu0
      %665 = vmatprep.mubr.bf16.mxu0 %v504
      %666 = vmatmul.mubr.bf16.gmra.mxu0 %v382
      %v667 = vpop.f32.mrf.mxu0
      %v668 = vadd.f32 0.0, %v667
      %v669 = vpop.f32.mrf.mxu0
      %v670 = vpop.f32.mrf.mxu0
      %v671 = vadd.f32 0.0, %v670
      %v672 = vpop.f32.mrf.mxu0
      %673 = vdwg.mxu0
      %v674 = vld [vmem:[%s2] sm:$0x1]
      %v676 = vlaneseq
      %v677 = vshrl.u32 %v676, 7
      %v678 = vsub.s32 0, %v677
      %v679 = vrot.slane %v674, %v678
      %v681 = vmul.f32 %v548, %v679
      %v682 = vmul.f32 %v551, %v679
      %v683 = vmul.f32 %v556, %v679
      %v684 = vmul.f32 %v559, %v679
      %v685 = vmul.f32 %v564, %v679
      %v686 = vmul.f32 %v567, %v679
      %v687 = vmul.f32 %v572, %v679
      %v688 = vmul.f32 %v575, %v679
      %v689 = vmul.f32 %v580, %v679
      %v690 = vmul.f32 %v583, %v679
      %v691 = vmul.f32 %v588, %v679
      %v692 = vmul.f32 %v591, %v679
      %v693 = vmul.f32 %v596, %v679
      %v694 = vmul.f32 %v599, %v679
      %v695 = vmul.f32 %v604, %v679
      %v696 = vmul.f32 %v607, %v679
      %v697 = vmul.f32 %v612, %v679
      %v698 = vmul.f32 %v615, %v679
      %v699 = vmul.f32 %v620, %v679
      %v700 = vmul.f32 %v623, %v679
      %v701 = vmul.f32 %v628, %v679
      %v702 = vmul.f32 %v631, %v679
      %v703 = vmul.f32 %v636, %v679
      %v704 = vmul.f32 %v639, %v679
      %v705 = vmul.f32 %v644, %v679
      %v706 = vmul.f32 %v647, %v679
      %v707 = vmul.f32 %v652, %v679
      %v708 = vmul.f32 %v655, %v679
      %v709 = vmul.f32 %v660, %v679
      %v710 = vmul.f32 %v663, %v679
      %v711 = vmul.f32 %v668, %v679
      %v712 = vmul.f32 %v671, %v679
      %v713 = vld [vmem:[%s3] sm:$0x1]
      %v715 = vlaneseq
      %v716 = vshrl.u32 %v715, 7
      %v717 = vsub.s32 0, %v716
      %v718 = vrot.slane %v713, %v717
      %v720 = vadd.f32 %v681, %v718
      %v721 = vadd.f32 %v682, %v718
      %v722 = vadd.f32 %v683, %v718
      %v723 = vadd.f32 %v684, %v718
      %v724 = vadd.f32 %v685, %v718
      %v725 = vadd.f32 %v686, %v718
      %v726 = vadd.f32 %v687, %v718
      %v727 = vadd.f32 %v688, %v718
      %v728 = vadd.f32 %v689, %v718
      %v729 = vadd.f32 %v690, %v718
      %v730 = vadd.f32 %v691, %v718
      %v731 = vadd.f32 %v692, %v718
      %v732 = vadd.f32 %v693, %v718
      %v733 = vadd.f32 %v694, %v718
      %v734 = vadd.f32 %v695, %v718
      %v735 = vadd.f32 %v696, %v718
      %v736 = vadd.f32 %v697, %v718
      %v737 = vadd.f32 %v698, %v718
      %v738 = vadd.f32 %v699, %v718
      %v739 = vadd.f32 %v700, %v718
      %v740 = vadd.f32 %v701, %v718
      %v741 = vadd.f32 %v702, %v718
      %v742 = vadd.f32 %v703, %v718
      %v743 = vadd.f32 %v704, %v718
      %v744 = vadd.f32 %v705, %v718
      %v745 = vadd.f32 %v706, %v718
      %v746 = vadd.f32 %v707, %v718
      %v747 = vadd.f32 %v708, %v718
      %v748 = vadd.f32 %v709, %v718
      %v749 = vadd.f32 %v710, %v718
      %v750 = vadd.f32 %v711, %v718
      %v751 = vadd.f32 %v712, %v718
      %v752 = vmax.f32 %v720, 0.0
      %v753 = vmax.f32 %v721, 0.0
      %v754 = vmax.f32 %v722, 0.0
      %v755 = vmax.f32 %v723, 0.0
      %v756 = vmax.f32 %v724, 0.0
      %v757 = vmax.f32 %v725, 0.0
      %v758 = vmax.f32 %v726, 0.0
      %v759 = vmax.f32 %v727, 0.0
      %v760 = vmax.f32 %v728, 0.0
      %v761 = vmax.f32 %v729, 0.0
      %v762 = vmax.f32 %v730, 0.0
      %v763 = vmax.f32 %v731, 0.0
      %v764 = vmax.f32 %v732, 0.0
      %v765 = vmax.f32 %v733, 0.0
      %v766 = vmax.f32 %v734, 0.0
      %v767 = vmax.f32 %v735, 0.0
      %v768 = vmax.f32 %v736, 0.0
      %v769 = vmax.f32 %v737, 0.0
      %v770 = vmax.f32 %v738, 0.0
      %v771 = vmax.f32 %v739, 0.0
      %v772 = vmax.f32 %v740, 0.0
      %v773 = vmax.f32 %v741, 0.0
      %v774 = vmax.f32 %v742, 0.0
      %v775 = vmax.f32 %v743, 0.0
      %v776 = vmax.f32 %v744, 0.0
      %v777 = vmax.f32 %v745, 0.0
      %v778 = vmax.f32 %v746, 0.0
      %v779 = vmax.f32 %v747, 0.0
      %v780 = vmax.f32 %v748, 0.0
      %v781 = vmax.f32 %v749, 0.0
      %v782 = vmax.f32 %v750, 0.0
      %v783 = vmax.f32 %v751, 0.0
      %vm784 = vcmask 130048
      %785 = vst.msk [vmem:[%s202] sm:$0xff] %vm784, %v752
      %786 = vst.msk [vmem:[%s202 + $0x8] sm:$0xff] %vm784, %v753
      %787 = vst.msk [vmem:[%s202 + $0x10] sm:$0xff] %vm784, %v754
      %788 = vst.msk [vmem:[%s202 + $0x18] sm:$0xff] %vm784, %v755
      %789 = vst.msk [vmem:[%s202 + $0x20] sm:$0xff] %vm784, %v756
      %790 = vst.msk [vmem:[%s202 + $0x28] sm:$0xff] %vm784, %v757
      %791 = vst.msk [vmem:[%s202 + $0x30] sm:$0xff] %vm784, %v758
      %792 = vst.msk [vmem:[%s202 + $0x38] sm:$0xff] %vm784, %v759
      %793 = vst.msk [vmem:[%s202 + $0x40] sm:$0xff] %vm784, %v760
      %794 = vst.msk [vmem:[%s202 + $0x48] sm:$0xff] %vm784, %v761
      %795 = vst.msk [vmem:[%s202 + $0x50] sm:$0xff] %vm784, %v762
      %796 = vst.msk [vmem:[%s202 + $0x58] sm:$0xff] %vm784, %v763
      %797 = vst.msk [vmem:[%s202 + $0x60] sm:$0xff] %vm784, %v764
      %798 = vst.msk [vmem:[%s202 + $0x68] sm:$0xff] %vm784, %v765
      %799 = vst.msk [vmem:[%s202 + $0x70] sm:$0xff] %vm784, %v766
      %800 = vst.msk [vmem:[%s202 + $0x78] sm:$0xff] %vm784, %v767
      %801 = vst.msk [vmem:[%s202 + $0x80] sm:$0xff] %vm784, %v768
      %802 = vst.msk [vmem:[%s202 + $0x88] sm:$0xff] %vm784, %v769
      %803 = vst.msk [vmem:[%s202 + $0x90] sm:$0xff] %vm784, %v770
      %804 = vst.msk [vmem:[%s202 + $0x98] sm:$0xff] %vm784, %v771
      %805 = vst.msk [vmem:[%s202 + $0xa0] sm:$0xff] %vm784, %v772
      %806 = vst.msk [vmem:[%s202 + $0xa8] sm:$0xff] %vm784, %v773
      %807 = vst.msk [vmem:[%s202 + $0xb0] sm:$0xff] %vm784, %v774
      %808 = vst.msk [vmem:[%s202 + $0xb8] sm:$0xff] %vm784, %v775
      %809 = vst.msk [vmem:[%s202 + $0xc0] sm:$0xff] %vm784, %v776
      %810 = vst.msk [vmem:[%s202 + $0xc8] sm:$0xff] %vm784, %v777
      %811 = vst.msk [vmem:[%s202 + $0xd0] sm:$0xff] %vm784, %v778
      %812 = vst.msk [vmem:[%s202 + $0xd8] sm:$0xff] %vm784, %v779
      %813 = vst.msk [vmem:[%s202 + $0xe0] sm:$0xff] %vm784, %v780
      %814 = vst.msk [vmem:[%s202 + $0xe8] sm:$0xff] %vm784, %v781
      %815 = vst.msk [vmem:[%s202 + $0xf0] sm:$0xff] %vm784, %v782
      %816 = vst.msk [vmem:[%s202 + $0xf8] sm:$0xff] %vm784, %v783
      %s817 = smul.u32 32, %s15
      %p818 = scmp.lt.s32.totalorder %s817, 63
      %s819 = scalar_select %p818, %s817, 63
      %s820 = smul.addr %s819, 8
      %s821 = scalar_lea.vmem %s4, %s820
      // Predicated region
      $region37: #{tpu_custom_call.1} parent=35 // pred_check
        %p822 = pneg %p122
      $region38: #{tpu_custom_call.1} parent=35 // pred_check_branch
        %824 = sbr.rel (%p822) target = $region40
      $region39: #{tpu_custom_call.1} parent=35 // pred_region
        %s825 = smul.u32 32, %s15
      $region40: #{tpu_custom_call.1} parent=35 // pred_fallthru
        _
    $region36: #{tpu_custom_call.1} parent=5 // pred_fallthru
      _
    %p826 = scmp.le.s32.totalorder 2, %s10
    // Predicated region
    $region41: #{tpu_custom_call.1} parent=5 // pred_check
      %p827 = pneg %p826
    $region42: #{tpu_custom_call.1} parent=5 // pred_check_branch
      %829 = sbr.rel (%p827) target = $region44
    $region43: #{tpu_custom_call.1} parent=5 // pred_region
      %s830 = ssub.s32 %s10, 2
      // Predicated region
      $region45: #{tpu_custom_call.1} parent=43 // pred_check
        %p831 = pneg %p128
      $region46: #{tpu_custom_call.1} parent=43 // pred_check_branch
        %833 = sbr.rel (%p831) target = $region48
      $region47: #{tpu_custom_call.1} parent=43 // pred_region
        %s834 = smul.u32 32, %s16
        %p835 = scmp.lt.s32.totalorder %s834, 63
        %s836 = scalar_select %p835, %s834, 63
        %s837 = smul.addr %s836, 8
        %s838 = scalar_lea.vmem %s4, %s837
      $region48: #{tpu_custom_call.1} parent=43 // pred_fallthru
        _
    $region44: #{tpu_custom_call.1} parent=5 // pred_fallthru
      _
  $region6: #{tpu_custom_call.1} parent=0 // loop_footer
    %s14 = sadd.s32 1, %s10
  $region7: #{tpu_custom_call.1} parent=0 // loop_footer_branch
    %9 = sbr.rel target = $region3
  $region8: #{tpu_custom_call.1} parent=0 // loop_exit
    _

</llo_original>
